<compile_context>
chip_gen: v7x
topology: tpu7x:2x2x1
jax: 0.10.0
libtpu: 0.0.40
codegen_flags: <defaults>
</compile_context>

<pallas_src>
import math

import jax
import jax.numpy as jnp
from jax import lax
from jax.experimental import pallas as pl
from jax.experimental.pallas import tpu as pltpu


# ----------------------------------------------------------------------------
# Kernel
# ----------------------------------------------------------------------------
def _pick_lane_chunk(tf, a, ch, max_elems=32768):
    """Lane width of the replicated pattern written per store.

    Must divide tf and be a multiple of `a` (each chunk is whole repeats of the
    length-A pattern).  Prefer the smallest multiple of 128 (full vreg rows ->
    unmasked stores, tiny tile/relayout cost); keep ch*lc bounded so the live
    set stays well inside the 64-vreg file.
    """
    budget = max(a, max_elems // max(ch, 1))
    hw = tf // a
    cands = [a * k for k in range(1, hw + 1) if hw % k == 0]
    dense = [c for c in cands if c % 128 == 0 and c <= budget]
    if dense:
        return dense[0]
    fallback = [c for c in cands if c <= min(budget, 512)]
    return fallback[-1] if fallback else cands[0]


def _arm_scalar_embedding_kernel(arm_ref, ang_ref, out_ref):
    # arm_ref: (TB, A)   batch-block of arm angles
    # ang_ref: (1, A)    angle sizes
    # out_ref: (TB, TF)  lane-dense slab of the flattened (H*W*A) output row
    TB, TF = out_ref.shape
    A = arm_ref.shape[-1]

    CH = math.gcd(TB, 8)                  # rows per inner chunk (sublane group)
    LC = _pick_lane_chunk(TF, A, CH)      # lanes written per store
    n_row = TB // CH
    n_lane = TF // LC
    reps = LC // A

    # Hoisted out of the loops (JAX does not CSE broadcast_in_dim).
    ang = jnp.broadcast_to(ang_ref[...], (CH, A))

    def row_body(c, carry):
        r0 = pl.multiple_of(c * CH, CH)
        scaled = arm_ref[pl.ds(r0, CH), :] / ang                 # (CH, A)
        pat = jnp.tile(scaled, (1, reps)).astype(out_ref.dtype)  # (CH, LC)

        def lane_body(f, carry2):
            f0 = pl.multiple_of(f * LC, LC)
            out_ref[pl.ds(r0, CH), pl.ds(f0, LC)] = pat
            return carry2

        return lax.fori_loop(0, n_lane, lane_body, carry, unroll=(n_lane <= 32))

    lax.fori_loop(0, n_row, row_body, 0, unroll=(n_row <= 8))


# ----------------------------------------------------------------------------
# Wrapper: generation-aware grid / block selection
# ----------------------------------------------------------------------------
def _chip_params():
    """Block-size target / TC count / VMEM cap per TPU generation."""
    kind = ""
    try:
        kind = jax.devices()[0].device_kind.lower()
    except Exception:
        pass
    if "v7" in kind:
        # 64 MiB physical VMEM -> modest live blocks, 32 MiB scoped cap; 2 TCs.
        return dict(target_bytes=8 << 20, num_tc=2, vmem_cap=32 << 20)
    if "v5 lite" in kind or "v5e" in kind or "v5lite" in kind:
        return dict(target_bytes=4 << 20, num_tc=1, vmem_cap=64 << 20)
    if "v4" in kind or "v5p" in kind:
        return dict(target_bytes=8 << 20, num_tc=2, vmem_cap=64 << 20)
    # v6e and default.
    return dict(target_bytes=8 << 20, num_tc=1, vmem_cap=64 << 20)


def _choose_grid(B, F, A, itemsize, target_bytes, num_tc):
    # --- batch blocking (rows per grid step) ---
    row_bytes = F * itemsize
    tb = max(1, int(target_bytes // max(row_bytes, 1)))
    tb = min(tb, B)
    if B > 8:
        # Keep tb a multiple of 8 so the 2-D BlockSpecs stay legal; the last
        # batch block may be partial (masked) instead of shrinking tb to 1.
        tb = min(max(8, (tb // 8) * 8), B if B % 8 == 0 else (B // 8) * 8)
        tb = max(tb, 8)
    bblocks = pl.cdiv(B, tb)

    # --- lane blocking of the flattened (H*W*A) row ---
    hw = F // A
    # Valid splits keep every block lane-dense ((F//fb) % 128 == 0) and aligned
    # to whole repeats of the length-A pattern (fb | H*W).
    valid = [fb for fb in range(1, hw + 1)
             if hw % fb == 0 and (F // fb) % 128 == 0] or [1]
    fblocks = 1
    for fb in valid:
        tf = F // fb
        too_big = tb * tf * itemsize > target_bytes
        unbalanced = (bblocks * fb) % num_tc != 0
        fblocks = fb
        if not too_big and not unbalanced:
            break
    tf = F // fblocks
    return tb, bblocks, tf, fblocks


def arm_scalar_embedding(arm, angle_sizes, box_size, *, small_batch_fast_path=False):
    """arm: (B, A); angle_sizes: (A,); box_size: (H, W).

    Returns (B, H, W, A) with out[b,h,w,a] = arm[b,a] / angle_sizes[a],
    matching the PyTorch module's divide + expand + double-transpose output.
    """
    B, A = arm.shape
    H, W = box_size
    F = H * W * A
    dtype = arm.dtype
    itemsize = jnp.dtype(dtype).itemsize

    ang = jnp.asarray(angle_sizes, dtype=dtype).reshape(1, A)

    if small_batch_fast_path and B * F * itemsize <= (64 << 10):
        # Tiny batches are 100% pallas_call fixed cost; let XLA fuse the
        # broadcast into the consumer instead of materializing it.
        return jnp.broadcast_to((arm / ang)[:, None, None, :], (B, H, W, A))

    params = _chip_params()
    tb, bblocks, tf, fblocks = _choose_grid(
        B, F, A, itemsize, params["target_bytes"], params["num_tc"])

    # Default depth-2 pipelining: ~2x the output block + small inputs live.
    block_bytes = (tb * tf + tb * A + A) * itemsize
    vmem_limit = int(min(params["vmem_cap"], max(8 << 20, 3 * block_bytes)))

    out_flat = pl.pallas_call(
        _arm_scalar_embedding_kernel,
        out_shape=jax.ShapeDtypeStruct((B, F), dtype),
        grid=(bblocks, fblocks),
        in_specs=[
            pl.BlockSpec((tb, A), lambda i, j: (i, 0)),
            pl.BlockSpec((1, A), lambda i, j: (0, 0)),
        ],
        out_specs=pl.BlockSpec((tb, tf), lambda i, j: (i, j)),
        compiler_params=pltpu.CompilerParams(
            dimension_semantics=("parallel", "parallel"),
            vmem_limit_bytes=vmem_limit,
        ),
    )(arm, ang)

    # Metadata-only reshape back to the module's (B, H, W, A) layout.
    return out_flat.reshape(B, H, W, A)


if __name__ == "__main__":
    # Module __init__ parameters (deterministic, in-script):
    box_size = (16, 16)                                     # spatial grid (H, W)
    angle_sizes = jnp.array([64., 32., 16., 8., 4., 2., 1., 1.],
                            dtype=jnp.float32)              # (A,) = 8 arm links

    # Example input: arm angles, shape (batch, n_arms)
    key = jax.random.PRNGKey(0)
    arm = jax.random.normal(key, (2, 8), dtype=jnp.float32) * 10.0

    out = arm_scalar_embedding(arm, angle_sizes, box_size)
    out = jax.block_until_ready(out)

    # Pure-JAX reference for the exact PyTorch semantics.
    scaled_ref = arm / angle_sizes[None, :]                                   # (B, A)
    ref = jnp.broadcast_to(scaled_ref[:, None, None, :],
                           (arm.shape[0], box_size[0], box_size[1], arm.shape[1]))

    assert out.shape == (2, 16, 16, 8), out.shape
    assert out.dtype == jnp.float32, out.dtype
    assert jnp.allclose(out, ref, atol=1e-6, rtol=1e-5)

    print("KERNEL_OK")
</pallas_src>

<mosaic_0001>
module attributes {stable_mosaic.version = 11 : i64} {
  func.func @_arm_scalar_embedding_kernel(%arg0: i32, %arg1: i32, %arg2: memref<2x8xf32, #tpu.memory_space<vmem>>, %arg3: memref<1x8xf32, #tpu.memory_space<vmem>>, %arg4: memref<2x2048xf32, #tpu.memory_space<vmem>>) attributes {dimension_semantics = [#tpu.dimension_semantics<parallel>, #tpu.dimension_semantics<parallel>], iteration_bounds = array<i64: 1, 1>, scalar_prefetch = 0 : i64, scratch_operands = 0 : i64, tpu.core_type = #tpu.core_type<tc>, window_params = [{transform_indices = @transform_0, window_bounds = array<i64: 2, 8>}, {pipeline_mode = #tpu.pipeline_mode<synchronous>, transform_indices = @transform_1, window_bounds = array<i64: 1, 8>}, {transform_indices = @transform_2, window_bounds = array<i64: 2, 2048>}]} {
    %c0 = arith.constant 0 : index
    %c0_0 = arith.constant 0 : index
    %0 = vector.load %arg3[%c0, %c0_0] : memref<1x8xf32, #tpu.memory_space<vmem>>, vector<1x8xf32>
    %1 = vector.shape_cast %0 : vector<1x8xf32> to vector<1x8xf32>
    %2 = vector.broadcast %1 : vector<1x8xf32> to vector<2x8xf32>
    %c0_i32 = arith.constant 0 : i32
    %c2_i32 = arith.constant 2 : i32
    %3 = arith.muli %c0_i32, %c2_i32 : i32
    %4 = tpu.assume_multiple %3, 2 : i32
    %5 = arith.index_cast %4 : i32 to index
    %c0_1 = arith.constant 0 : index
    %6 = vector.load %arg2[%5, %c0_1] : memref<2x8xf32, #tpu.memory_space<vmem>>, vector<2x8xf32>
    %7 = arith.divf %6, %2 : vector<2x8xf32>
    %8 = tpu.concatenate %7, %7, %7, %7, %7, %7, %7, %7, %7, %7, %7, %7, %7, %7, %7, %7 in 1 : vector<2x8xf32>, vector<2x8xf32>, vector<2x8xf32>, vector<2x8xf32>, vector<2x8xf32>, vector<2x8xf32>, vector<2x8xf32>, vector<2x8xf32>, vector<2x8xf32>, vector<2x8xf32>, vector<2x8xf32>, vector<2x8xf32>, vector<2x8xf32>, vector<2x8xf32>, vector<2x8xf32>, vector<2x8xf32> -> vector<2x128xf32>
    %c0_i32_2 = arith.constant 0 : i32
    %c128_i32 = arith.constant 128 : i32
    %9 = arith.muli %c0_i32_2, %c128_i32 : i32
    %10 = tpu.assume_multiple %9, 128 : i32
    %11 = arith.index_cast %4 : i32 to index
    %12 = arith.index_cast %10 : i32 to index
    %13 = vector.load %arg4[%11, %12] : memref<2x2048xf32, #tpu.memory_space<vmem>>, vector<2x128xf32>
    tpu.vector_store %arg4[%11, %12], %8 {strides = array<i32>} : memref<2x2048xf32, #tpu.memory_space<vmem>>, vector<2x128xf32>,
    %c1_i32 = arith.constant 1 : i32
    %c128_i32_3 = arith.constant 128 : i32
    %14 = arith.muli %c1_i32, %c128_i32_3 : i32
    %15 = tpu.assume_multiple %14, 128 : i32
    %16 = arith.index_cast %4 : i32 to index
    %17 = arith.index_cast %15 : i32 to index
    %18 = vector.load %arg4[%16, %17] : memref<2x2048xf32, #tpu.memory_space<vmem>>, vector<2x128xf32>
    tpu.vector_store %arg4[%16, %17], %8 {strides = array<i32>} : memref<2x2048xf32, #tpu.memory_space<vmem>>, vector<2x128xf32>,
    %c2_i32_4 = arith.constant 2 : i32
    %c128_i32_5 = arith.constant 128 : i32
    %19 = arith.muli %c2_i32_4, %c128_i32_5 : i32
    %20 = tpu.assume_multiple %19, 128 : i32
    %21 = arith.index_cast %4 : i32 to index
    %22 = arith.index_cast %20 : i32 to index
    %23 = vector.load %arg4[%21, %22] : memref<2x2048xf32, #tpu.memory_space<vmem>>, vector<2x128xf32>
    tpu.vector_store %arg4[%21, %22], %8 {strides = array<i32>} : memref<2x2048xf32, #tpu.memory_space<vmem>>, vector<2x128xf32>,
    %c3_i32 = arith.constant 3 : i32
    %c128_i32_6 = arith.constant 128 : i32
    %24 = arith.muli %c3_i32, %c128_i32_6 : i32
    %25 = tpu.assume_multiple %24, 128 : i32
    %26 = arith.index_cast %4 : i32 to index
    %27 = arith.index_cast %25 : i32 to index
    %28 = vector.load %arg4[%26, %27] : memref<2x2048xf32, #tpu.memory_space<vmem>>, vector<2x128xf32>
    tpu.vector_store %arg4[%26, %27], %8 {strides = array<i32>} : memref<2x2048xf32, #tpu.memory_space<vmem>>, vector<2x128xf32>,
    %c4_i32 = arith.constant 4 : i32
    %c128_i32_7 = arith.constant 128 : i32
    %29 = arith.muli %c4_i32, %c128_i32_7 : i32
    %30 = tpu.assume_multiple %29, 128 : i32
    %31 = arith.index_cast %4 : i32 to index
    %32 = arith.index_cast %30 : i32 to index
    %33 = vector.load %arg4[%31, %32] : memref<2x2048xf32, #tpu.memory_space<vmem>>, vector<2x128xf32>
    tpu.vector_store %arg4[%31, %32], %8 {strides = array<i32>} : memref<2x2048xf32, #tpu.memory_space<vmem>>, vector<2x128xf32>,
    %c5_i32 = arith.constant 5 : i32
    %c128_i32_8 = arith.constant 128 : i32
    %34 = arith.muli %c5_i32, %c128_i32_8 : i32
    %35 = tpu.assume_multiple %34, 128 : i32
    %36 = arith.index_cast %4 : i32 to index
    %37 = arith.index_cast %35 : i32 to index
    %38 = vector.load %arg4[%36, %37] : memref<2x2048xf32, #tpu.memory_space<vmem>>, vector<2x128xf32>
    tpu.vector_store %arg4[%36, %37], %8 {strides = array<i32>} : memref<2x2048xf32, #tpu.memory_space<vmem>>, vector<2x128xf32>,
    %c6_i32 = arith.constant 6 : i32
    %c128_i32_9 = arith.constant 128 : i32
    %39 = arith.muli %c6_i32, %c128_i32_9 : i32
    %40 = tpu.assume_multiple %39, 128 : i32
    %41 = arith.index_cast %4 : i32 to index
    %42 = arith.index_cast %40 : i32 to index
    %43 = vector.load %arg4[%41, %42] : memref<2x2048xf32, #tpu.memory_space<vmem>>, vector<2x128xf32>
    tpu.vector_store %arg4[%41, %42], %8 {strides = array<i32>} : memref<2x2048xf32, #tpu.memory_space<vmem>>, vector<2x128xf32>,
    %c7_i32 = arith.constant 7 : i32
    %c128_i32_10 = arith.constant 128 : i32
    %44 = arith.muli %c7_i32, %c128_i32_10 : i32
    %45 = tpu.assume_multiple %44, 128 : i32
    %46 = arith.index_cast %4 : i32 to index
    %47 = arith.index_cast %45 : i32 to index
    %48 = vector.load %arg4[%46, %47] : memref<2x2048xf32, #tpu.memory_space<vmem>>, vector<2x128xf32>
    tpu.vector_store %arg4[%46, %47], %8 {strides = array<i32>} : memref<2x2048xf32, #tpu.memory_space<vmem>>, vector<2x128xf32>,
    %c8_i32 = arith.constant 8 : i32
    %c128_i32_11 = arith.constant 128 : i32
    %49 = arith.muli %c8_i32, %c128_i32_11 : i32
    %50 = tpu.assume_multiple %49, 128 : i32
    %51 = arith.index_cast %4 : i32 to index
    %52 = arith.index_cast %50 : i32 to index
    %53 = vector.load %arg4[%51, %52] : memref<2x2048xf32, #tpu.memory_space<vmem>>, vector<2x128xf32>
    tpu.vector_store %arg4[%51, %52], %8 {strides = array<i32>} : memref<2x2048xf32, #tpu.memory_space<vmem>>, vector<2x128xf32>,
    %c9_i32 = arith.constant 9 : i32
    %c128_i32_12 = arith.constant 128 : i32
    %54 = arith.muli %c9_i32, %c128_i32_12 : i32
    %55 = tpu.assume_multiple %54, 128 : i32
    %56 = arith.index_cast %4 : i32 to index
    %57 = arith.index_cast %55 : i32 to index
    %58 = vector.load %arg4[%56, %57] : memref<2x2048xf32, #tpu.memory_space<vmem>>, vector<2x128xf32>
    tpu.vector_store %arg4[%56, %57], %8 {strides = array<i32>} : memref<2x2048xf32, #tpu.memory_space<vmem>>, vector<2x128xf32>,
    %c10_i32 = arith.constant 10 : i32
    %c128_i32_13 = arith.constant 128 : i32
    %59 = arith.muli %c10_i32, %c128_i32_13 : i32
    %60 = tpu.assume_multiple %59, 128 : i32
    %61 = arith.index_cast %4 : i32 to index
    %62 = arith.index_cast %60 : i32 to index
    %63 = vector.load %arg4[%61, %62] : memref<2x2048xf32, #tpu.memory_space<vmem>>, vector<2x128xf32>
    tpu.vector_store %arg4[%61, %62], %8 {strides = array<i32>} : memref<2x2048xf32, #tpu.memory_space<vmem>>, vector<2x128xf32>,
    %c11_i32 = arith.constant 11 : i32
    %c128_i32_14 = arith.constant 128 : i32
    %64 = arith.muli %c11_i32, %c128_i32_14 : i32
    %65 = tpu.assume_multiple %64, 128 : i32
    %66 = arith.index_cast %4 : i32 to index
    %67 = arith.index_cast %65 : i32 to index
    %68 = vector.load %arg4[%66, %67] : memref<2x2048xf32, #tpu.memory_space<vmem>>, vector<2x128xf32>
    tpu.vector_store %arg4[%66, %67], %8 {strides = array<i32>} : memref<2x2048xf32, #tpu.memory_space<vmem>>, vector<2x128xf32>,
    %c12_i32 = arith.constant 12 : i32
    %c128_i32_15 = arith.constant 128 : i32
    %69 = arith.muli %c12_i32, %c128_i32_15 : i32
    %70 = tpu.assume_multiple %69, 128 : i32
    %71 = arith.index_cast %4 : i32 to index
    %72 = arith.index_cast %70 : i32 to index
    %73 = vector.load %arg4[%71, %72] : memref<2x2048xf32, #tpu.memory_space<vmem>>, vector<2x128xf32>
    tpu.vector_store %arg4[%71, %72], %8 {strides = array<i32>} : memref<2x2048xf32, #tpu.memory_space<vmem>>, vector<2x128xf32>,
    %c13_i32 = arith.constant 13 : i32
    %c128_i32_16 = arith.constant 128 : i32
    %74 = arith.muli %c13_i32, %c128_i32_16 : i32
    %75 = tpu.assume_multiple %74, 128 : i32
    %76 = arith.index_cast %4 : i32 to index
    %77 = arith.index_cast %75 : i32 to index
    %78 = vector.load %arg4[%76, %77] : memref<2x2048xf32, #tpu.memory_space<vmem>>, vector<2x128xf32>
    tpu.vector_store %arg4[%76, %77], %8 {strides = array<i32>} : memref<2x2048xf32, #tpu.memory_space<vmem>>, vector<2x128xf32>,
    %c14_i32 = arith.constant 14 : i32
    %c128_i32_17 = arith.constant 128 : i32
    %79 = arith.muli %c14_i32, %c128_i32_17 : i32
    %80 = tpu.assume_multiple %79, 128 : i32
    %81 = arith.index_cast %4 : i32 to index
    %82 = arith.index_cast %80 : i32 to index
    %83 = vector.load %arg4[%81, %82] : memref<2x2048xf32, #tpu.memory_space<vmem>>, vector<2x128xf32>
    tpu.vector_store %arg4[%81, %82], %8 {strides = array<i32>} : memref<2x2048xf32, #tpu.memory_space<vmem>>, vector<2x128xf32>,
    %c15_i32 = arith.constant 15 : i32
    %c128_i32_18 = arith.constant 128 : i32
    %84 = arith.muli %c15_i32, %c128_i32_18 : i32
    %85 = tpu.assume_multiple %84, 128 : i32
    %86 = arith.index_cast %4 : i32 to index
    %87 = arith.index_cast %85 : i32 to index
    %88 = vector.load %arg4[%86, %87] : memref<2x2048xf32, #tpu.memory_space<vmem>>, vector<2x128xf32>
    tpu.vector_store %arg4[%86, %87], %8 {strides = array<i32>} : memref<2x2048xf32, #tpu.memory_space<vmem>>, vector<2x128xf32>,
    %c16_i32 = arith.constant 16 : i32
    %c1_i32_19 = arith.constant 1 : i32
    return
  }
  func.func @transform_0(%arg0: i32, %arg1: i32) -> (i32, i32) {
    %c0_i32 = arith.constant 0 : i32
    %c0_i32_0 = arith.constant 0 : i32
    return %arg0, %c0_i32 : i32, i32
  }
  func.func @transform_1(%arg0: i32, %arg1: i32) -> (i32, i32) {
    %c0_i32 = arith.constant 0 : i32
    %c0_i32_0 = arith.constant 0 : i32
    %c0_i32_1 = arith.constant 0 : i32
    return %c0_i32, %c0_i32_0 : i32, i32
  }
  func.func @transform_2(%arg0: i32, %arg1: i32) -> (i32, i32) {
    %c0_i32 = arith.constant 0 : i32
    return %arg0, %arg1 : i32, i32
  }
}

</mosaic_0001>

<llo_original>
// kernel: tpu_custom_call.1
$region0: #{tpu_custom_call.1}
  #allocation0 [shape = 'u32[]', space=smem, size = 0x4, offset = 0x4, fixed_abs, tag = 'smem constant byte address 0x4 - core index']
  #allocation1 [shape = 'u32[144,128]{1,0:T(1,128)}', space=vmem, size = 0x12000, scoped, tag = 'internal scratch']
  %s0 = inlined_call_operand.hbm [shape: f32[2,8], index: 0, kind: input, shape index: {}]
  %s1 = inlined_call_operand.vmem [shape: f32[1,8], index: 1, kind: input, shape index: {}]
  %s2 = inlined_call_operand.hbm [shape: f32[2,2048], index: 2, kind: output, shape index: {}]
  %s3 = sld [smem:[#allocation0]]
  $region22: #{tpu_custom_call.1} parent=0
    _
  %s5 = ssub.s32 1, %s3
  %s6 = scalar_select 0, %s5, %s3
  $region1: #{tpu_custom_call.1} parent=0
    #allocation2 [shape = 'u8[1024]{0}', space=vmem, size = 0x400, scoped, tag = 'input window, operand 0, single buffered']
    #allocation3 [shape = 's32[1]{0}', space=sflag, size = 0x4, scoped, tag = 'scoped memory for tpu_custom_call.1']
    #allocation4 [shape = 's32[1]{0}', space=sflag, size = 0x4, scoped, tag = 'scoped memory for tpu_custom_call.1']
    #allocation5 [shape = 'u8[16384]{0}', space=vmem, size = 0x4000, scoped, tag = 'output window, operand 0, single buffered']
    %7 = vsyncpa [#allocation3], 0
    %8 = vsyncpa [#allocation4], 0
    // Predicated region
    $region2: #{tpu_custom_call.1} parent=1 // pred_check
      _
    $region3: #{tpu_custom_call.1} parent=1 // pred_check_branch
      %10 = sbr.rel (0) target = $region5
    $region4: #{tpu_custom_call.1} parent=1 // pred_region
      %s12 = ssub.s32 32, 32
      %13 = vsyncadd [#allocation3], %s12
      %s15 = sshll.u32 [#allocation2], 4
      %s16 = int_to_ptr.vmem [resolvable:$true] %s15
      %18 = dma.hbm_to_vmem [thread:$0]  %s0, 32, %s16, [#allocation3]
    $region5: #{tpu_custom_call.1} parent=1 // pred_fallthru
      _
    // Predicated region
    $region6: #{tpu_custom_call.1} parent=1 // pred_check
      _
    $region7: #{tpu_custom_call.1} parent=1 // pred_check_branch
      %20 = sbr.rel (0) target = $region9
    $region8: #{tpu_custom_call.1} parent=1 // pred_region
      _
    $region9: #{tpu_custom_call.1} parent=1 // pred_fallthru
      _
    // Predicated region
    $region10: #{tpu_custom_call.1} parent=1 // pred_check
      _
    $region11: #{tpu_custom_call.1} parent=1 // pred_check_branch
      %22 = sbr.rel (0) target = $region13
    $region12: #{tpu_custom_call.1} parent=1 // pred_region
      %23 = dma.done [#allocation3], 32
    $region13: #{tpu_custom_call.1} parent=1 // pred_fallthru
      _
    %v24 = vld [vmem:[%s1] sm:$0x1]
    %v26 = vlaneseq
    %v27 = vshrl.u32 %v26, 7
    %v28 = vsub.s32 0, %v27
    %v29 = vrot.slane %v24, %v28
    %v31 = vld [vmem:[#allocation2] sm:$0x3]
    %v32 = vrcp.pop %v29
    %v33 = vmul.f32 %v31, %v32
    %35 = vrot.lane.b32.xlu0 %v33, 8
    %v36 = vpop.permute.xlu0 %35
    %38 = vrot.lane.b32.xlu0 %v33, 16
    %v39 = vpop.permute.xlu0 %38
    %41 = vrot.lane.b32.xlu0 %v33, 24
    %v42 = vpop.permute.xlu0 %41
    %44 = vrot.lane.b32.xlu0 %v33, 32
    %v45 = vpop.permute.xlu0 %44
    %47 = vrot.lane.b32.xlu0 %v33, 40
    %v48 = vpop.permute.xlu0 %47
    %50 = vrot.lane.b32.xlu0 %v33, 48
    %v51 = vpop.permute.xlu0 %50
    %53 = vrot.lane.b32.xlu0 %v33, 56
    %v54 = vpop.permute.xlu0 %53
    %56 = vrot.lane.b32.xlu0 %v33, 64
    %v57 = vpop.permute.xlu0 %56
    %59 = vrot.lane.b32.xlu0 %v33, 72
    %v60 = vpop.permute.xlu0 %59
    %62 = vrot.lane.b32.xlu0 %v33, 80
    %v63 = vpop.permute.xlu0 %62
    %65 = vrot.lane.b32.xlu0 %v33, 88
    %v66 = vpop.permute.xlu0 %65
    %68 = vrot.lane.b32.xlu0 %v33, 96
    %v69 = vpop.permute.xlu0 %68
    %71 = vrot.lane.b32.xlu0 %v33, 104
    %v72 = vpop.permute.xlu0 %71
    %74 = vrot.lane.b32.xlu0 %v33, 112
    %v75 = vpop.permute.xlu0 %74
    %77 = vrot.lane.b32.xlu0 %v33, 120
    %v78 = vpop.permute.xlu0 %77
    %vm80 = vcmask 64512
    %v81 = vsel %vm80, %v33, %v36
    %vm82 = vcmask 130048
    %v83 = vsel %vm82, %v81, %v39
    %vm84 = vcmask 195584
    %v85 = vsel %vm84, %v83, %v42
    %vm86 = vcmask 261120
    %v87 = vsel %vm86, %v85, %v45
    %vm88 = vcmask 326656
    %v89 = vsel %vm88, %v87, %v48
    %vm90 = vcmask 392192
    %v91 = vsel %vm90, %v89, %v51
    %vm92 = vcmask 457728
    %v93 = vsel %vm92, %v91, %v54
    %vm94 = vcmask 523264
    %v95 = vsel %vm94, %v93, %v57
    %vm96 = vcmask 588800
    %v97 = vsel %vm96, %v95, %v60
    %vm98 = vcmask 654336
    %v99 = vsel %vm98, %v97, %v63
    %vm100 = vcmask 719872
    %v101 = vsel %vm100, %v99, %v66
    %vm102 = vcmask 785408
    %v103 = vsel %vm102, %v101, %v69
    %vm104 = vcmask 850944
    %v105 = vsel %vm104, %v103, %v72
    %vm106 = vcmask 916480
    %v107 = vsel %vm106, %v105, %v75
    %vm108 = vcmask 982016
    %v109 = vsel %vm108, %v107, %v78
    %s110 = smul.u32 0, 16
    %s111 = sadd.s32 0, %s110
    %s112 = smul.addr %s111, 2
    %s113 = scalar_lea.vmem [#allocation5], %s112
    %114 = vst [vmem:[%s113] sm:$0x3] %v109
    %s115 = sadd.s32 1, %s110
    %s116 = smul.addr %s115, 2
    %s117 = scalar_lea.vmem [#allocation5], %s116
    %118 = vst [vmem:[%s117] sm:$0x3] %v109
    %s119 = sadd.s32 2, %s110
    %s120 = smul.addr %s119, 2
    %s121 = scalar_lea.vmem [#allocation5], %s120
    %122 = vst [vmem:[%s121] sm:$0x3] %v109
    %s123 = sadd.s32 3, %s110
    %s124 = smul.addr %s123, 2
    %s125 = scalar_lea.vmem [#allocation5], %s124
    %126 = vst [vmem:[%s125] sm:$0x3] %v109
    %s127 = sadd.s32 4, %s110
    %s128 = smul.addr %s127, 2
    %s129 = scalar_lea.vmem [#allocation5], %s128
    %130 = vst [vmem:[%s129] sm:$0x3] %v109
    %s131 = sadd.s32 5, %s110
    %s132 = smul.addr %s131, 2
    %s133 = scalar_lea.vmem [#allocation5], %s132
    %134 = vst [vmem:[%s133] sm:$0x3] %v109
    %s135 = sadd.s32 6, %s110
    %s136 = smul.addr %s135, 2
    %s137 = scalar_lea.vmem [#allocation5], %s136
    %138 = vst [vmem:[%s137] sm:$0x3] %v109
    %s139 = sadd.s32 7, %s110
    %s140 = smul.addr %s139, 2
    %s141 = scalar_lea.vmem [#allocation5], %s140
    %142 = vst [vmem:[%s141] sm:$0x3] %v109
    %s143 = sadd.s32 8, %s110
    %s144 = smul.addr %s143, 2
    %s145 = scalar_lea.vmem [#allocation5], %s144
    %146 = vst [vmem:[%s145] sm:$0x3] %v109
    %s147 = sadd.s32 9, %s110
    %s148 = smul.addr %s147, 2
    %s149 = scalar_lea.vmem [#allocation5], %s148
    %150 = vst [vmem:[%s149] sm:$0x3] %v109
    %s151 = sadd.s32 10, %s110
    %s152 = smul.addr %s151, 2
    %s153 = scalar_lea.vmem [#allocation5], %s152
    %154 = vst [vmem:[%s153] sm:$0x3] %v109
    %s155 = sadd.s32 11, %s110
    %s156 = smul.addr %s155, 2
    %s157 = scalar_lea.vmem [#allocation5], %s156
    %158 = vst [vmem:[%s157] sm:$0x3] %v109
    %s159 = sadd.s32 12, %s110
    %s160 = smul.addr %s159, 2
    %s161 = scalar_lea.vmem [#allocation5], %s160
    %162 = vst [vmem:[%s161] sm:$0x3] %v109
    %s163 = sadd.s32 13, %s110
    %s164 = smul.addr %s163, 2
    %s165 = scalar_lea.vmem [#allocation5], %s164
    %166 = vst [vmem:[%s165] sm:$0x3] %v109
    %s167 = sadd.s32 14, %s110
    %s168 = smul.addr %s167, 2
    %s169 = scalar_lea.vmem [#allocation5], %s168
    %170 = vst [vmem:[%s169] sm:$0x3] %v109
    %s171 = sadd.s32 15, %s110
    %s172 = smul.addr %s171, 2
    %s173 = scalar_lea.vmem [#allocation5], %s172
    %174 = vst [vmem:[%s173] sm:$0x3] %v109
    // Predicated region
    $region14: #{tpu_custom_call.1} parent=1 // pred_check
      _
    $region15: #{tpu_custom_call.1} parent=1 // pred_check_branch
      %176 = sbr.rel (0) target = $region17
    $region16: #{tpu_custom_call.1} parent=1 // pred_region
      %s178 = ssub.s32 512, 512
      %179 = vsyncadd [#allocation4], %s178
      %s181 = sshll.u32 [#allocation5], 4
      %s182 = int_to_ptr.vmem [resolvable:$true] %s181
      %184 = dma.vmem_to_hbm [thread:$0]  %s182, 512, %s2, [#allocation4]
    $region17: #{tpu_custom_call.1} parent=1 // pred_fallthru
      _
    // Predicated region
    $region18: #{tpu_custom_call.1} parent=1 // pred_check
      _
    $region19: #{tpu_custom_call.1} parent=1 // pred_check_branch
      %186 = sbr.rel (0) target = $region21
    $region20: #{tpu_custom_call.1} parent=1 // pred_region
      %187 = dma.done [#allocation4], 512
    $region21: #{tpu_custom_call.1} parent=1 // pred_fallthru
      _
    %188 = vsyncpa [#allocation3], 1
    %189 = vsyncpa [#allocation4], 1

</llo_original>
